<compile_context>
chip_gen: v7x
topology: tpu7x:2x2x1
jax: 0.10.0
libtpu: 0.0.40
codegen_flags: <defaults>
</compile_context>

<pallas_src>
import functools

import jax
import jax.numpy as jnp
from jax.experimental import pallas as pl
from jax.experimental.pallas import tpu as pltpu

_LANE = 128
_SUBLANE = 8


def _round_up(x, m):
    return (x + m - 1) // m * m


def _vmem_bytes():
    """Physical VMEM per core (best-effort query, conservative fallback)."""
    default = 64 * 1024 * 1024  # v7x has the smallest VMEM -> safe everywhere
    try:
        info = pltpu.get_tpu_info()
        v = getattr(info, "vmem_capacity_bytes", None)
        v = int(v) if v else default
        return v if v >= 16 * 1024 * 1024 else default
    except Exception:
        return default


def prepare_embed_weights(mat, mat1):
    """Fuse + transpose + lane-pad the two projection matrices ONCE.

    mat, mat1: (S, D).  Returns w of shape (D, 2*S_blk), S_blk = round_up(S, 128):
    columns [0, S_blk) hold mat.T, columns [S_blk, 2*S_blk) hold mat1.T (zero
    padded).  Call this at parameter-init time, NOT per forward call.
    """
    S, D = mat.shape
    assert mat1.shape == (S, D)
    S_blk = _round_up(S, _LANE)
    w0, w1 = mat.T, mat1.T
    if S_blk != S:
        pad = ((0, 0), (0, S_blk - S))
        w0 = jnp.pad(w0, pad)
        w1 = jnp.pad(w1, pad)
    return jnp.concatenate([w0, w1], axis=1)  # (D, 2*S_blk)


# ---------------------------------------------------------------------------
# Kernels
# ---------------------------------------------------------------------------
def _embed_resident_kernel(x_ref, w_ref, o1_ref, o2_ref):
    # x_ref: (tm, D); w_ref: (D, 2*S_blk) resident; o1/o2: (tm, S_blk)
    res = jnp.dot(x_ref[...], w_ref[...], preferred_element_type=jnp.float32)
    s = o1_ref.shape[-1]                       # S_blk, a multiple of 128
    o1_ref[...] = res[:, :s].astype(o1_ref.dtype)   # lane-aligned split
    o2_ref[...] = res[:, s:].astype(o2_ref.dtype)


def _embed_tiled_kernel(x_ref, w_ref, o_ref):
    # x_ref: (tm, D); w_ref: (D, tn); o_ref: (tm, tn)
    o_ref[...] = jnp.dot(
        x_ref[...], w_ref[...], preferred_element_type=jnp.float32
    ).astype(o_ref.dtype)


# ---------------------------------------------------------------------------
# Tiling policy
# ---------------------------------------------------------------------------
def _choose_tiles(M, D, S2, budget_bytes):
    bpe = 4  # f32
    # Rows: multiple of 8 sublanes, cap 512 (~85% HBM roofline per measured
    # tiling data); prefer a divisor of M so the activation pad disappears.
    tm = max(_SUBLANE, min(_round_up(M, _SUBLANE), 512))
    if M % _SUBLANE == 0:
        for t in range(tm, _LANE - 1, -_SUBLANE):
            if M % t == 0:
                tm = t
                break

    def max_tn(tm_):
        # 2x (double buffering) * (x tile + w tile + out tile) * 4B <= budget
        rem = budget_bytes // (2 * bpe) - tm_ * D
        if rem <= 0:
            return 0
        cap = rem // (D + tm_)
        k = S2 // _LANE
        best = 0
        for d in range(1, k + 1):          # tn must divide the fused width
            if k % d == 0 and d * _LANE <= cap:
                best = d * _LANE
        return best

    tn = max_tn(tm)
    while tn == 0 and tm > _SUBLANE:
        tm = max(_SUBLANE, (tm // 2) // _SUBLANE * _SUBLANE)
        tn = max_tn(tm)
    if tn == 0:                            # absurdly large D; best effort
        tm, tn = _SUBLANE, _LANE
    return tm, tn


# ---------------------------------------------------------------------------
# Forward
# ---------------------------------------------------------------------------
def embed_forward(x, fused_w, size):
    """x: (B, L, D); fused_w: from prepare_embed_weights; size = S.

    Returns (emb_span, emb_word), each (B, L, size).
    """
    B, L, D = x.shape
    Dw, S2 = fused_w.shape
    assert Dw == D and S2 % (2 * _LANE) == 0
    S_blk = S2 // 2
    assert size <= S_blk
    M = B * L
    dtype = x.dtype

    phys_vmem = _vmem_bytes()
    budget = min(int(phys_vmem * 0.70), 100 * 1024 * 1024)      # working set
    vmem_limit = min(int(phys_vmem * 0.90), 120 * 1024 * 1024)  # scoped limit

    tm, tn = _choose_tiles(M, D, S2, budget)
    resident = tn == S2

    # Ensure >=2 "parallel" row steps when the grid would collapse, so the
    # v7x megacore (2 TCs) actually gets both cores working.
    if resident and pl.cdiv(M, tm) == 1 and tm >= 16 and tm % 16 == 0:
        tm //= 2

    M_pad = _round_up(M, tm)
    x2d = x.reshape(M, D)
    if M_pad != M:
        x2d = jnp.pad(x2d, ((0, M_pad - M), (0, 0)))
    n_i = M_pad // tm

    flops = 2 * M_pad * S2 * D

    if resident:
        # Weight DMA'd once (constant block index), outputs written as two
        # lane-dense halves directly from the kernel.
        bytes_accessed = 4 * (M_pad * D + D * S2 + M_pad * S2)
        o1, o2 = pl.pallas_call(
            _embed_resident_kernel,
            out_shape=(
                jax.ShapeDtypeStruct((M_pad, S_blk), dtype),
                jax.ShapeDtypeStruct((M_pad, S_blk), dtype),
            ),
            grid_spec=pltpu.PrefetchScalarGridSpec(
                num_scalar_prefetch=0,
                grid=(n_i,),
                in_specs=[
                    pl.BlockSpec((tm, D), lambda i: (i, 0)),
                    pl.BlockSpec((D, S2), lambda i: (0, 0)),   # resident weight
                ],
                out_specs=[
                    pl.BlockSpec((tm, S_blk), lambda i: (i, 0)),
                    pl.BlockSpec((tm, S_blk), lambda i: (i, 0)),
                ],
            ),
            compiler_params=pltpu.CompilerParams(
                dimension_semantics=("parallel",),
                vmem_limit_bytes=vmem_limit,
            ),
            cost_estimate=pl.CostEstimate(
                flops=flops, transcendentals=0, bytes_accessed=bytes_accessed
            ),
        )(x2d, fused_w)
        emb_span = o1[:M, :size].reshape(B, L, size)
        emb_word = o2[:M, :size].reshape(B, L, size)
        return emb_span, emb_word

    # ---- fallback: weight too large for a resident block --------------------
    n_j = S2 // tn
    traffic_row_outer = n_i * D * S2 + M_pad * D      # weight re-streamed per i
    traffic_col_outer = D * S2 + n_j * M_pad * D      # weight loaded once
    weight_outer = traffic_col_outer < traffic_row_outer
    if weight_outer:
        grid = (n_j, n_i)
        x_spec = pl.BlockSpec((tm, D), lambda j, i: (i, 0))
        w_spec = pl.BlockSpec((D, tn), lambda j, i: (0, j))
        o_spec = pl.BlockSpec((tm, tn), lambda j, i: (i, j))
        bytes_accessed = 4 * (traffic_col_outer + M_pad * S2)
    else:
        grid = (n_i, n_j)
        x_spec = pl.BlockSpec((tm, D), lambda i, j: (i, 0))
        w_spec = pl.BlockSpec((D, tn), lambda i, j: (0, j))
        o_spec = pl.BlockSpec((tm, tn), lambda i, j: (i, j))
        bytes_accessed = 4 * (traffic_row_outer + M_pad * S2)

    out = pl.pallas_call(
        _embed_tiled_kernel,
        out_shape=jax.ShapeDtypeStruct((M_pad, S2), dtype),
        grid_spec=pltpu.PrefetchScalarGridSpec(
            num_scalar_prefetch=0,
            grid=grid,
            in_specs=[x_spec, w_spec],
            out_specs=o_spec,
        ),
        compiler_params=pltpu.CompilerParams(
            dimension_semantics=("parallel", "parallel"),
            vmem_limit_bytes=vmem_limit,
        ),
        cost_estimate=pl.CostEstimate(
            flops=flops, transcendentals=0, bytes_accessed=bytes_accessed
        ),
    )(x2d, fused_w)
    emb_span = out[:M, :size].reshape(B, L, size)
    emb_word = out[:M, S_blk:S_blk + size].reshape(B, L, size)
    return emb_span, emb_word


def embed_apply(x, mat, mat1):
    """Convenience one-shot API (fuses weights per call; prefer hoisting)."""
    return embed_forward(x, prepare_embed_weights(mat, mat1), mat.shape[0])


if __name__ == "__main__":
    # Small shapes consistent with the module: batch=2, length=8,
    # input_size (dim) = 32, size = 64.
    B, L, D, S = 2, 8, 32, 64

    key = jax.random.PRNGKey(0)
    kx, kw0, kw1 = jax.random.split(key, 3)

    x = jax.random.normal(kx, (B, L, D), dtype=jnp.float32)
    # Deterministic "normal_()" init of the parameters, as in reset_parameters().
    mat = jax.random.normal(kw0, (S, D), dtype=jnp.float32)
    mat1 = jax.random.normal(kw1, (S, D), dtype=jnp.float32)

    # Weight fusion hoisted to "parameter init" time (done once, not per call).
    fused_w = prepare_embed_weights(mat, mat1)
    fused_w = jax.block_until_ready(fused_w)

    fwd = jax.jit(embed_forward, static_argnums=(2,))
    emb_span, emb_word = fwd(x, fused_w, S)
    jax.block_until_ready((emb_span, emb_word))

    # Reference check against plain JAX (same math as torch.mm(emb, mat.t())).
    ref_span = jnp.einsum("bld,sd->bls", x, mat)
    ref_word = jnp.einsum("bld,sd->bls", x, mat1)
    assert emb_span.shape == (B, L, S) and emb_word.shape == (B, L, S)
    assert jnp.allclose(emb_span, ref_span, atol=1e-4, rtol=1e-4)
    assert jnp.allclose(emb_word, ref_word, atol=1e-4, rtol=1e-4)

    print("KERNEL_OK")
</pallas_src>

<mosaic_0001>
module attributes {stable_mosaic.version = 11 : i64} {
  func.func @_embed_resident_kernel(%arg0: i32, %arg1: memref<8x32xf32, #tpu.memory_space<vmem>>, %arg2: memref<32x256xf32, #tpu.memory_space<vmem>>, %arg3: memref<8x128xf32, #tpu.memory_space<vmem>>, %arg4: memref<8x128xf32, #tpu.memory_space<vmem>>) attributes {dimension_semantics = [#tpu.dimension_semantics<parallel>], iteration_bounds = array<i64: 2>, scalar_prefetch = 0 : i64, scratch_operands = 0 : i64, tpu.core_type = #tpu.core_type<tc>, window_params = [{transform_indices = @transform_0, window_bounds = array<i64: 8, 32>}, {pipeline_mode = #tpu.pipeline_mode<synchronous>, transform_indices = @transform_1, window_bounds = array<i64: 32, 256>}, {transform_indices = @transform_2, window_bounds = array<i64: 8, 128>}, {transform_indices = @transform_3, window_bounds = array<i64: 8, 128>}]} {
    %c0 = arith.constant 0 : index
    %c0_0 = arith.constant 0 : index
    %0 = vector.load %arg1[%c0, %c0_0] : memref<8x32xf32, #tpu.memory_space<vmem>>, vector<8x32xf32>
    %c0_1 = arith.constant 0 : index
    %c0_2 = arith.constant 0 : index
    %1 = vector.load %arg2[%c0_1, %c0_2] : memref<32x256xf32, #tpu.memory_space<vmem>>, vector<32x256xf32>
    %cst = arith.constant dense<0.000000e+00> : vector<8x256xf32>
    %2 = tpu.matmul %0, %1, %cst {dimension_numbers = #tpu.dot_dimension_numbers<[1], [0], [0], [1], [0, 0, 1, 1], [], []>} : vector<8x32xf32>, vector<32x256xf32>, vector<8x256xf32> -> vector<8x256xf32>
    %3 = vector.extract_strided_slice %2 {offsets = [0, 0], sizes = [8, 128], strides = [1, 1]} : vector<8x256xf32> to vector<8x128xf32>
    %c0_3 = arith.constant 0 : index
    %c0_4 = arith.constant 0 : index
    %4 = vector.load %arg3[%c0_3, %c0_4] : memref<8x128xf32, #tpu.memory_space<vmem>>, vector<8x128xf32>
    tpu.vector_store %arg3[%c0_3, %c0_4], %3 {strides = array<i32>} : memref<8x128xf32, #tpu.memory_space<vmem>>, vector<8x128xf32>,
    %5 = vector.extract_strided_slice %2 {offsets = [0, 128], sizes = [8, 128], strides = [1, 1]} : vector<8x256xf32> to vector<8x128xf32>
    %c0_5 = arith.constant 0 : index
    %c0_6 = arith.constant 0 : index
    %6 = vector.load %arg4[%c0_5, %c0_6] : memref<8x128xf32, #tpu.memory_space<vmem>>, vector<8x128xf32>
    tpu.vector_store %arg4[%c0_5, %c0_6], %5 {strides = array<i32>} : memref<8x128xf32, #tpu.memory_space<vmem>>, vector<8x128xf32>,
    return
  }
  func.func @transform_0(%arg0: i32) -> (i32, i32) {
    %c0_i32 = arith.constant 0 : i32
    %c0_i32_0 = arith.constant 0 : i32
    return %arg0, %c0_i32 : i32, i32
  }
  func.func @transform_1(%arg0: i32) -> (i32, i32) {
    %c0_i32 = arith.constant 0 : i32
    %c0_i32_0 = arith.constant 0 : i32
    %c0_i32_1 = arith.constant 0 : i32
    return %c0_i32, %c0_i32_0 : i32, i32
  }
  func.func @transform_2(%arg0: i32) -> (i32, i32) {
    %c0_i32 = arith.constant 0 : i32
    %c0_i32_0 = arith.constant 0 : i32
    return %arg0, %c0_i32 : i32, i32
  }
  func.func @transform_3(%arg0: i32) -> (i32, i32) {
    %c0_i32 = arith.constant 0 : i32
    %c0_i32_0 = arith.constant 0 : i32
    return %arg0, %c0_i32 : i32, i32
  }
}

</mosaic_0001>

<llo_original>
// kernel: embed_forward.1
$region0: #{embed_forward.1}
  #allocation0 [shape = 'u32[]', space=smem, size = 0x4, offset = 0x4, fixed_abs, tag = 'smem constant byte address 0x4 - core index']
  #allocation1 [shape = 'u32[144,128]{1,0:T(1,128)}', space=vmem, size = 0x12000, scoped, tag = 'internal scratch']
  %s0 = inlined_call_operand.hbm [shape: f32[16,32], index: 0, kind: input, shape index: {}]
  %s1 = inlined_call_operand.hbm [shape: f32[32,256], index: 1, kind: input, shape index: {}]
  %s2 = inlined_call_operand.vmem [shape: f32[16,128], index: 2, kind: output, shape index: {0}]
  %s3 = inlined_call_operand.vmem [shape: f32[16,128], index: 3, kind: output, shape index: {1}]
  %4 = xla_tuple %s2, %s3
  %s5 = sld [smem:[#allocation0]]
  $region57: #{embed_forward.1} parent=0
    _
  %s7 = ssub.s32 1, %s5
  %s8 = scalar_select 0, %s7, %s5
  $region1: #{embed_forward.1} parent=0
    #allocation2 [shape = 'u8[8192]{0}', space=vmem, size = 0x2000, scoped, tag = 'input window, operand 0']
    #allocation3 [shape = 's32[2]{0}', space=sflag, size = 0x8, scoped, tag = 'scoped memory for embed_forward.1']
    #allocation4 [shape = 'u8[32768]{0}', space=vmem, size = 0x8000, scoped, tag = 'input window, operand 1, single buffered']
    #allocation5 [shape = 's32[1]{0}', space=sflag, size = 0x4, scoped, tag = 'scoped memory for embed_forward.1']
    %9 = vsyncpa [#allocation3], 0
    %s10 = scalar_lea.sflag [#allocation3], 1
    %11 = vsyncpa %s10, 0
    %12 = vsyncpa [#allocation5], 0
    loop: start=0, step=1, limit=4
    $region2: #{embed_forward.1} parent=1 // loop_pre_header
      _
    $region3: #{embed_forward.1} parent=1 // loop_header
      %s14 = sphi 0, %s18
      %p15 = scmp.ge.s32.totalorder %s14, 4
      %s24 = sphi 0, %s26
      %s27 = sphi 0, %s24
      %s28 = sphi 0, %s27
      %s44 = sphi 0, %s28
      %s48 = sphi 0, %s48
      %s50 = sphi 0, %s48
      %s51 = sphi 0, %s50
      %s65 = sphi 0, %s51
      %s71 = sphi 0, %s73
      %s74 = sphi 0, %s71
      %s75 = sphi 0, %s74
      %s91 = sphi 0, %s75
      %s97 = sphi 0, %s99
      %s100 = sphi 0, %s97
      %s101 = sphi 0, %s100
      %s117 = sphi 0, %s101
    $region4: #{embed_forward.1} parent=1 // loop_header_branch
      %17 = sbr.rel (%p15) target = $region8
    $region5: #{embed_forward.1} parent=1 // loop_body
      %s19 = ssub.s32 %s14, 1
      %s20 = ssub.s32 %s14, 2
      %s21 = sadd.s32 %s14, 1
      %s22 = ssub.s32 %s14, %s21
      %p23 = scmp.eq.s32.totalorder %s22, 0
      %s25 = sadd.s32 %s24, 1
      %s26 = scalar_select %p23, %s24, %s25
      %p29 = pneg %p23
      %p30 = scmp.eq.s32.totalorder %s14, 1
      %p31 = por %p29, %p30
      %p32 = scmp.ne.s32.totalorder %s24, %s27
      %p33 = scmp.eq.s32.totalorder %s14, 0
      %p34 = por %p32, %p33
      %p35 = scmp.ne.s32.totalorder %s24, %s27
      %p36 = scmp.eq.s32.totalorder %s19, 1
      %p37 = por %p35, %p36
      %p38 = scmp.ne.s32.totalorder %s27, %s28
      %p39 = scmp.eq.s32.totalorder %s19, 0
      %p40 = por %p38, %p39
      %p41 = scmp.ne.s32.totalorder %s27, %s28
      %p42 = scmp.eq.s32.totalorder %s20, 1
      %p43 = por %p41, %p42
      %p45 = scmp.ne.s32.totalorder %s28, %s44
      %p46 = scmp.eq.s32.totalorder %s20, 0
      %p47 = por %p45, %p46
      %s49 = sadd.s32 %s48, 1
      %p52 = scmp.eq.s32.totalorder %s14, 1
      %p53 = scmp.ne.s32.totalorder %s48, %s50
      %p54 = scmp.eq.s32.totalorder %s14, 0
      %p55 = por %p53, %p54
      %p56 = scmp.ne.s32.totalorder %s48, %s50
      %p57 = scmp.eq.s32.totalorder %s19, 1
      %p58 = por %p56, %p57
      %p59 = scmp.ne.s32.totalorder %s50, %s51
      %p60 = scmp.eq.s32.totalorder %s19, 0
      %p61 = por %p59, %p60
      %p62 = scmp.ne.s32.totalorder %s50, %s51
      %p63 = scmp.eq.s32.totalorder %s20, 1
      %p64 = por %p62, %p63
      %p66 = scmp.ne.s32.totalorder %s51, %s65
      %p67 = scmp.eq.s32.totalorder %s20, 0
      %p68 = por %p66, %p67
      %s69 = ssub.s32 %s14, %s21
      %p70 = scmp.eq.s32.totalorder %s69, 0
      %s72 = sadd.s32 %s71, 1
      %s73 = scalar_select %p70, %s71, %s72
      %p76 = pneg %p70
      %p77 = scmp.eq.s32.totalorder %s14, 1
      %p78 = por %p76, %p77
      %p79 = scmp.ne.s32.totalorder %s71, %s74
      %p80 = scmp.eq.s32.totalorder %s14, 0
      %p81 = por %p79, %p80
      %p82 = scmp.ne.s32.totalorder %s71, %s74
      %p83 = scmp.eq.s32.totalorder %s19, 1
      %p84 = por %p82, %p83
      %p85 = scmp.ne.s32.totalorder %s74, %s75
      %p86 = scmp.eq.s32.totalorder %s19, 0
      %p87 = por %p85, %p86
      %p88 = scmp.ne.s32.totalorder %s74, %s75
      %p89 = scmp.eq.s32.totalorder %s20, 1
      %p90 = por %p88, %p89
      %p92 = scmp.ne.s32.totalorder %s75, %s91
      %p93 = scmp.eq.s32.totalorder %s20, 0
      %p94 = por %p92, %p93
      %s95 = ssub.s32 %s14, %s21
      %p96 = scmp.eq.s32.totalorder %s95, 0
      %s98 = sadd.s32 %s97, 1
      %s99 = scalar_select %p96, %s97, %s98
      %p102 = pneg %p96
      %p103 = scmp.eq.s32.totalorder %s14, 1
      %p104 = por %p102, %p103
      %p105 = scmp.ne.s32.totalorder %s97, %s100
      %p106 = scmp.eq.s32.totalorder %s14, 0
      %p107 = por %p105, %p106
      %p108 = scmp.ne.s32.totalorder %s97, %s100
      %p109 = scmp.eq.s32.totalorder %s19, 1
      %p110 = por %p108, %p109
      %p111 = scmp.ne.s32.totalorder %s100, %s101
      %p112 = scmp.eq.s32.totalorder %s19, 0
      %p113 = por %p111, %p112
      %p114 = scmp.ne.s32.totalorder %s100, %s101
      %p115 = scmp.eq.s32.totalorder %s20, 1
      %p116 = por %p114, %p115
      %p118 = scmp.ne.s32.totalorder %s101, %s117
      %p119 = scmp.eq.s32.totalorder %s20, 0
      %p120 = por %p118, %p119
      %p121 = scmp.le.s32.totalorder 1, %s14
      %p122 = scmp.lt.s32.totalorder %s14, 3
      %p123 = pnand %p121, %p122
      %p124 = pneg %p123
      // Predicated region
      $region9: #{embed_forward.1} parent=5 // pred_check
        _
      $region10: #{embed_forward.1} parent=5 // pred_check_branch
        %126 = sbr.rel (%p123) target = $region12
      $region11: #{embed_forward.1} parent=5 // pred_region
        %s127 = ssub.s32 %s14, 1
        // Predicated region
        $region13: #{embed_forward.1} parent=11 // pred_check
          %p128 = pneg %p61
        $region14: #{embed_forward.1} parent=11 // pred_check_branch
          %130 = sbr.rel (%p128) target = $region16
        $region15: #{embed_forward.1} parent=11 // pred_region
          %s132 = ssub.s32 1024, 1024
          %133 = vsyncadd [#allocation5], %s132
          %s134 = sshll.u32 [#allocation4], 4
          %s135 = int_to_ptr.vmem [resolvable:$true] %s134
          %140 = dma.hbm_to_vmem [thread:$0]  %s1, 1024, %s135, [#allocation5], 256, 256, 16
        $region16: #{embed_forward.1} parent=11 // pred_fallthru
          _
      $region12: #{embed_forward.1} parent=5 // pred_fallthru
        _
      %p141 = scmp.lt.s32.totalorder %s14, 2
      // Predicated region
      $region17: #{embed_forward.1} parent=5 // pred_check
        %p142 = pneg %p141
      $region18: #{embed_forward.1} parent=5 // pred_check_branch
        %144 = sbr.rel (%p142) target = $region20
      $region19: #{embed_forward.1} parent=5 // pred_region
        // Predicated region
        $region21: #{embed_forward.1} parent=19 // pred_check
          %p145 = pneg %p34
        $region22: #{embed_forward.1} parent=19 // pred_check_branch
          %147 = sbr.rel (%p145) target = $region24
        $region23: #{embed_forward.1} parent=19 // pred_region
          %s148 = sand.u32 %s24, 1
          %s149 = scalar_lea.sflag [#allocation3], %s148
          %s150 = sand.u32 %s24, 1
          %s151 = smul.addr %s150, 8
          %s152 = scalar_lea.vmem [#allocation2], %s151
          %s154 = ssub.s32 128, 128
          %155 = vsyncadd %s149, %s154
          %s156 = smul.addr %s14, 128
          %s157 = scalar_lea.hbm %s0, %s156
          %s159 = sshll.u32 %s152, 4
          %s160 = int_to_ptr.vmem [resolvable:$true] %s159
          %162 = dma.hbm_to_vmem [thread:$0]  %s157, 128, %s160, %s149
        $region24: #{embed_forward.1} parent=19 // pred_fallthru
          _
      $region20: #{embed_forward.1} parent=5 // pred_fallthru
        _
      %p163 = scmp.le.s32.totalorder 1, %s14
      %p164 = scmp.lt.s32.totalorder %s14, 3
      %p165 = pnand %p163, %p164
      %p166 = pneg %p165
      // Predicated region
      $region25: #{embed_forward.1} parent=5 // pred_check
        _
      $region26: #{embed_forward.1} parent=5 // pred_check_branch
        %168 = sbr.rel (%p165) target = $region28
      $region27: #{embed_forward.1} parent=5 // pred_region
        %s169 = ssub.s32 %s14, 1
        %s170 = sand.u32 %s27, 1
        %s171 = scalar_lea.sflag [#allocation3], %s170
        %s172 = sand.u32 %s27, 1
        %s173 = smul.addr %s172, 8
        %s174 = scalar_lea.vmem [#allocation2], %s173
        // Predicated region
        $region29: #{embed_forward.1} parent=27 // pred_check
          %p175 = pneg %p40
        $region30: #{embed_forward.1} parent=27 // pred_check_branch
          %177 = sbr.rel (%p175) target = $region32
        $region31: #{embed_forward.1} parent=27 // pred_region
          %178 = dma.done %s171, 128
        $region32: #{embed_forward.1} parent=27 // pred_fallthru
          _
        // Predicated region
        $region33: #{embed_forward.1} parent=27 // pred_check
          %p179 = pneg %p61
        $region34: #{embed_forward.1} parent=27 // pred_check_branch
          %181 = sbr.rel (%p179) target = $region36
        $region35: #{embed_forward.1} parent=27 // pred_region
          %182 = dma.done [#allocation5], 1024
        $region36: #{embed_forward.1} parent=27 // pred_fallthru
          _
        %s183 = sand.u32 %s27, 1
        %s184 = scalar_lea.sflag [#allocation3], %s183
        %s185 = sand.u32 %s27, 1
        %s186 = smul.addr %s185, 8
        %s187 = scalar_lea.vmem [#allocation2], %s186
        %p188 = pneg %p40
        %p189 = pneg %p37
        %p190 = pneg %p61
        %p191 = pneg %p58
        %p192 = pneg %p87
        %p193 = pneg %p84
        %p194 = scmp.lt.s32.totalorder %s19, 1
        %s195 = scalar_select %p194, %s19, 1
        %s196 = smul.addr %s195, 8
        %s197 = scalar_lea.vmem %s2, %s196
        %p198 = pneg %p113
        %p199 = pneg %p110
        %p200 = scmp.lt.s32.totalorder %s19, 1
        %s201 = scalar_select %p200, %s19, 1
        %s202 = smul.addr %s201, 8
        %s203 = scalar_lea.vmem %s3, %s202
        %p204 = scmp.lt.s32.totalorder %s19, 1
        %s205 = scalar_select %p204, %s19, 1
        %s206 = smul.addr %s205, 8
        %s207 = scalar_lea.vmem %s2, %s206
        %p208 = scmp.lt.s32.totalorder %s19, 1
        %s209 = scalar_select %p208, %s19, 1
        %s210 = smul.addr %s209, 8
        %s211 = scalar_lea.vmem %s3, %s210
        %v212 = vld [vmem:[%s174] sm:$0xff]
        %v213 = vld [vmem:[#allocation4] sm:$0xff]
        %v214 = vld [vmem:[#allocation4 + $0x8] sm:$0xff]
        %v215 = vld [vmem:[#allocation4 + $0x10] sm:$0xff]
        %v216 = vld [vmem:[#allocation4 + $0x18] sm:$0xff]
        %v217 = vld [vmem:[#allocation4 + $0x20] sm:$0xff]
        %v218 = vld [vmem:[#allocation4 + $0x28] sm:$0xff]
        %v219 = vld [vmem:[#allocation4 + $0x30] sm:$0xff]
        %v220 = vld [vmem:[#allocation4 + $0x38] sm:$0xff]
        %vm221 = vcmask 261120
        %v223 = vsel %vm221, %v212, 0
        %225 = vmatprep.subr.mxu0 %v214
        %226 = vmatpush1.msra.mxu0 %v213
        %227 = vmatprep.subr.mxu0 %v216
        %228 = vmatpush1.msra.mxu0 %v215
        %229 = vmatprep.subr.mxu0 %v218
        %230 = vmatpush1.msra.mxu0 %v217
        %231 = vmatprep.subr.mxu0 %v220
        %232 = vmatpush1.msra.mxu0 %v219
        %233 = vmatprep.subr.mxu0 0.0
        %234 = vmatpush1.msra.mxu0 0.0
        %235 = vmatprep.subr.mxu0 0.0
        %236 = vmatpush1.msra.mxu0 0.0
        %237 = vmatprep.subr.mxu0 0.0
        %238 = vmatpush1.msra.mxu0 0.0
        %239 = vmatprep.subr.mxu0 0.0
        %240 = vmatpush1.msra.mxu0 0.0
        %241 = vmatprep.subr.mxu0 0.0
        %242 = vmatpush1.msra.mxu0 0.0
        %243 = vmatprep.subr.mxu0 0.0
        %244 = vmatpush1.msra.mxu0 0.0
        %245 = vmatprep.subr.mxu0 0.0
        %246 = vmatpush1.msra.mxu0 0.0
        %247 = vmatprep.subr.mxu0 0.0
        %248 = vmatpush1.msra.mxu0 0.0
        %249 = vmatprep.subr.mxu0 0.0
        %250 = vmatpush1.msra.mxu0 0.0
        %251 = vmatprep.subr.mxu0 0.0
        %252 = vmatpush1.msra.mxu0 0.0
        %253 = vmatprep.subr.mxu0 0.0
        %254 = vmatpush1.msra.mxu0 0.0
        %255 = vmatprep.subr.mxu0 0.0
        %256 = vmatpush1.msra.mxu0 0.0
        %257 = vmatprep.subr.mxu0 0.0
        %258 = vmatpush1.msra.mxu0 0.0
        %259 = vmatprep.subr.mxu0 0.0
        %260 = vmatpush1.msra.mxu0 0.0
        %261 = vmatprep.subr.mxu0 0.0
        %262 = vmatpush1.msra.mxu0 0.0
        %263 = vmatprep.subr.mxu0 0.0
        %264 = vmatpush1.msra.mxu0 0.0
        %265 = vmatprep.subr.mxu0 0.0
        %266 = vmatpush1.msra.mxu0 0.0
        %267 = vmatprep.subr.mxu0 0.0
        %268 = vmatpush1.msra.mxu0 0.0
        %269 = vmatprep.subr.mxu0 0.0
        %270 = vmatpush1.msra.mxu0 0.0
        %271 = vmatprep.subr.mxu0 0.0
        %272 = vmatpush1.msra.mxu0 0.0
        %273 = vmatprep.subr.mxu0 0.0
        %274 = vmatpush1.msra.mxu0 0.0
        %275 = vmatprep.subr.mxu0 0.0
        %276 = vmatpush1.msra.mxu0 0.0
        %277 = vmatprep.subr.mxu0 0.0
        %278 = vmatpush1.msra.mxu0 0.0
        %279 = vmatprep.subr.mxu0 0.0
        %280 = vmatpush1.msra.mxu0 0.0
        %281 = vmatprep.subr.mxu0 0.0
        %282 = vmatpush1.msra.mxu0 0.0
        %283 = vmatprep.subr.mxu0 0.0
        %284 = vmatpush1.msra.mxu0 0.0
        %285 = vmatprep.subr.mxu0 0.0
        %286 = vmatpush1.msra.mxu0 0.0
        %287 = vmatprep.subr.mxu0 0.0
        %288 = vmatpush1.msra.mxu0 0.0
        %289 = vmatprep.mubr.f32.mxu0 0.0
        %290 = vmatmul.mubr.f32.gmra.mrb[0].mxu0 %v223
        %v291 = vpop.f32.mrb[0].mxu0
        %v292 = vadd.f32 0.0, %v291
        %v293 = vpop.f32.mrb[0].mxu0
        %v294 = vadd.f32 0.0, %v293
        %295 = vdwg.mxu0
        %296 = vst [vmem:[%s207] sm:$0xff] %v292
        %297 = vst [vmem:[%s211] sm:$0xff] %v294
        %p298 = scmp.lt.s32.totalorder %s19, 1
        %s299 = scalar_select %p298, %s19, 1
        %s300 = smul.addr %s299, 8
        %s301 = scalar_lea.vmem %s2, %s300
        %p302 = scmp.lt.s32.totalorder %s19, 1
        %s303 = scalar_select %p302, %s19, 1
        %s304 = smul.addr %s303, 8
        %s305 = scalar_lea.vmem %s3, %s304
        // Predicated region
        $region37: #{embed_forward.1} parent=27 // pred_check
          %p306 = pneg %p84
        $region38: #{embed_forward.1} parent=27 // pred_check_branch
          %308 = sbr.rel (%p306) target = $region40
        $region39: #{embed_forward.1} parent=27 // pred_region
          _
        $region40: #{embed_forward.1} parent=27 // pred_fallthru
          _
        // Predicated region
        $region41: #{embed_forward.1} parent=27 // pred_check
          %p309 = pneg %p110
        $region42: #{embed_forward.1} parent=27 // pred_check_branch
          %311 = sbr.rel (%p309) target = $region44
        $region43: #{embed_forward.1} parent=27 // pred_region
          _
        $region44: #{embed_forward.1} parent=27 // pred_fallthru
          _
      $region28: #{embed_forward.1} parent=5 // pred_fallthru
        _
      %p312 = scmp.le.s32.totalorder 2, %s14
      // Predicated region
      $region45: #{embed_forward.1} parent=5 // pred_check
        %p313 = pneg %p312
      $region46: #{embed_forward.1} parent=5 // pred_check_branch
        %315 = sbr.rel (%p313) target = $region48
      $region47: #{embed_forward.1} parent=5 // pred_region
        %s316 = ssub.s32 %s14, 2
        // Predicated region
        $region49: #{embed_forward.1} parent=47 // pred_check
          %p317 = pneg %p90
        $region50: #{embed_forward.1} parent=47 // pred_check_branch
          %319 = sbr.rel (%p317) target = $region52
        $region51: #{embed_forward.1} parent=47 // pred_region
          %p320 = scmp.lt.s32.totalorder %s20, 1
          %s321 = scalar_select %p320, %s20, 1
          %s322 = smul.addr %s321, 8
          %s323 = scalar_lea.vmem %s2, %s322
        $region52: #{embed_forward.1} parent=47 // pred_fallthru
          _
        // Predicated region
        $region53: #{embed_forward.1} parent=47 // pred_check
          %p324 = pneg %p116
        $region54: #{embed_forward.1} parent=47 // pred_check_branch
          %326 = sbr.rel (%p324) target = $region56
        $region55: #{embed_forward.1} parent=47 // pred_region
          %p327 = scmp.lt.s32.totalorder %s20, 1
          %s328 = scalar_select %p327, %s20, 1
          %s329 = smul.addr %s328, 8
          %s330 = scalar_lea.vmem %s3, %s329
        $region56: #{embed_forward.1} parent=47 // pred_fallthru
          _
      $region48: #{embed_forward.1} parent=5 // pred_fallthru
        _
    $region6: #{embed_forward.1} parent=1 // loop_footer
      %s18 = sadd.s32 1, %s14
    $region7: #{embed_forward.1} parent=1 // loop_footer_branch
      %13 = sbr.rel target = $region3
    $region8: #{embed_forward.1} parent=1 // loop_exit
      _
    %331 = vsyncpa [#allocation3], 1
    %s332 = scalar_lea.sflag [#allocation3], 1
    %333 = vsyncpa %s332, 1
    %334 = vsyncpa [#allocation5], 1

</llo_original>
